<compile_context>
chip_gen: v7x
topology: tpu7x:2x2x1
jax: 0.10.0
libtpu: 0.0.40
codegen_flags: <defaults>
</compile_context>

<pallas_src>
import jax
import jax.numpy as jnp
from jax import lax
from jax.experimental import pallas as pl
from jax.experimental.pallas import tpu as pltpu

NEG_SLOPE = 0.01   # nn.LeakyReLU default
BN_EPS = 1e-5      # nn.BatchNorm1d default


def _leaky_relu(x):
    return jnp.where(x > 0, x, NEG_SLOPE * x)


def _round_up(x, m):
    return ((x + m - 1) // m) * m


# ----------------------------------------------------------------------------
# Kernel
# ----------------------------------------------------------------------------
def decoder_kernel(z_ref,
                   w1_ref, b1_ref,
                   w2_ref, b2_ref,
                   w3_ref, b3_ref,
                   out_ref):
    # ---- fclayer 1: Linear(nz -> nh_pad) + LeakyReLU ----
    # K is padded to 8 host-side and the matmul runs on the (otherwise idle)
    # MXU; this avoids nz per-k lane extracts + 128-lane broadcasts on the XLU.
    h = jnp.dot(z_ref[...], w1_ref[...], preferred_element_type=jnp.float32)
    h = h + b1_ref[...]                      # biases are f32
    h = _leaky_relu(h)

    # ---- fclayer 2: Linear(nh -> nh) with eval-BatchNorm pre-folded + LeakyReLU ----
    h = jnp.dot(h.astype(w2_ref.dtype), w2_ref[...],
                preferred_element_type=jnp.float32)
    h = h + b2_ref[...]
    h = _leaky_relu(h)

    # ---- fclayer 3: Linear(nh -> nin_pad) + Tanh ----
    h = jnp.dot(h.astype(w3_ref.dtype), w3_ref[...],
                preferred_element_type=jnp.float32)
    h = h + b3_ref[...]
    out_ref[...] = jnp.tanh(h).astype(out_ref.dtype)


# ----------------------------------------------------------------------------
# Parameter init (mimics PyTorch defaults) and one-time operand preparation
# ----------------------------------------------------------------------------
def init_decoder_params(key, nz, nh, nin, dtype=jnp.float32):
    """PyTorch nn.Linear-style init (U[-1/sqrt(fan_in), +1/sqrt(fan_in)]) + BN stats."""
    ks = jax.random.split(key, 6)

    def lin(kw, kb, fan_in, fan_out):
        bound = 1.0 / jnp.sqrt(jnp.asarray(fan_in, dtype))
        w = jax.random.uniform(kw, (fan_in, fan_out), dtype, -bound, bound)
        b = jax.random.uniform(kb, (1, fan_out), dtype, -bound, bound)
        return w, b

    w1, b1 = lin(ks[0], ks[1], nz, nh)
    w2, b2 = lin(ks[2], ks[3], nh, nh)
    w3, b3 = lin(ks[4], ks[5], nh, nin)

    gamma = jnp.ones((1, nh), dtype)
    beta = jnp.zeros((1, nh), dtype)
    running_mean = jnp.zeros((1, nh), dtype)
    running_var = jnp.ones((1, nh), dtype)

    return dict(w1=w1, b1=b1, w2=w2, b2=b2,
                gamma=gamma, beta=beta, mean=running_mean, var=running_var,
                w3=w3, b3=b3)


def prepare_decoder_params(params, *, use_bf16=True):
    """One-time prep: fold eval BN into Linear #2, zero-pad to MXU/lane-friendly
    shapes, cast matmul operands. Call once; reuse the result for every forward."""
    nz, nh = params["w1"].shape
    nin = params["w3"].shape[1]

    # ---- fold eval-mode BatchNorm into the second Linear ----
    scale = params["gamma"] * lax.rsqrt(params["var"] + BN_EPS)         # (1, nh)
    w2f = params["w2"] * scale                                          # column scale
    b2f = (params["b2"] - params["mean"]) * scale + params["beta"]

    # ---- padding ----
    # nz -> multiple of 8 (sublane-aligned K for the layer-1 MXU matmul)
    # nh -> 128 lanes, or 256 when nh > 128 (full-width v6e/v7x MXU tiles)
    # nin -> multiple of 128 (lane-dense output writeback; pad sliced off later)
    # Zero padding is exact: padded lanes are 0 after layer 1 (zero cols of w1,
    # zero bias), stay 0 through LeakyReLU, contribute 0 via zero rows of w2'/w3.
    nzp = _round_up(max(nz, 1), 8)
    nhp = _round_up(nh, 256) if nh > 128 else _round_up(nh, 128)
    ninp = _round_up(nin, 128)

    mm_dtype = jnp.bfloat16 if use_bf16 else jnp.float32
    ph, pn = nhp - nh, ninp - nin

    w1 = jnp.pad(params["w1"], ((0, nzp - nz), (0, ph))).astype(mm_dtype)
    b1 = jnp.pad(params["b1"], ((0, 0), (0, ph))).astype(jnp.float32)
    w2 = jnp.pad(w2f, ((0, ph), (0, ph))).astype(mm_dtype)
    b2 = jnp.pad(b2f, ((0, 0), (0, ph))).astype(jnp.float32)
    w3 = jnp.pad(params["w3"], ((0, ph), (0, pn))).astype(mm_dtype)
    b3 = jnp.pad(params["b3"], ((0, 0), (0, pn))).astype(jnp.float32)

    return dict(w1=w1, b1=b1, w2=w2, b2=b2, w3=w3, b3=b3,
                nz=nz, nzp=nzp, nh=nh, nhp=nhp, nin=nin, ninp=ninp,
                mm_dtype=mm_dtype)


# ----------------------------------------------------------------------------
# Forward wrapper
# ----------------------------------------------------------------------------
def _choose_batch_tile(B, batch_tile):
    """Batch tile: multiple of 16 (sublane-safe for f32 and bf16 blocks) and
    capped so the grid has >=2 steps whenever the batch allows it, so the
    "parallel" grid axis can shard across v7x's two TensorCores."""
    Bp16 = _round_up(max(B, 1), 16)
    tb = max(16, (int(batch_tile) // 16) * 16)
    tb = min(tb, Bp16)
    if Bp16 >= 32:
        tb = min(tb, _round_up(Bp16 // 2, 16))
    return tb


def decoder_forward(z, prepared, imgsize, *, batch_tile=512, out_dtype=jnp.float32):
    """z: [B, nz] float32, prepared = prepare_decoder_params(...)
    -> imgs: [B, 1, imgsize, imgsize] of out_dtype."""
    B, nz = z.shape
    assert nz == prepared["nz"]
    nin, ninp = prepared["nin"], prepared["ninp"]
    nzp, nhp = prepared["nzp"], prepared["nhp"]
    assert nin == imgsize * imgsize

    TB = _choose_batch_tile(B, batch_tile)
    Bp = _round_up(B, TB)

    # Per-call input prep is tiny: pad batch + K, cast to the matmul dtype.
    zp = jnp.pad(z, ((0, Bp - B), (0, nzp - nz))).astype(prepared["mm_dtype"])

    w1, b1 = prepared["w1"], prepared["b1"]
    w2, b2 = prepared["w2"], prepared["b2"]
    w3, b3 = prepared["w3"], prepared["b3"]
    operands = (zp, w1, b1, w2, b2, w3, b3)

    # VMEM budget: single-buffered weights + double-buffered z/out tiles +
    # generous headroom for f32 intermediates; capped for v7x's 64 MiB physical.
    out_itemsize = jnp.dtype(out_dtype).itemsize
    weight_bytes = sum(int(a.nbytes) for a in (w1, b1, w2, b2, w3, b3))
    io_bytes = 2 * TB * (nzp * zp.dtype.itemsize + ninp * out_itemsize)
    interm_bytes = 4 * TB * (nhp + ninp) * 4
    vmem_limit = int(min(48 << 20,
                         max(24 << 20, 2 * (weight_bytes + io_bytes + interm_bytes))))

    cost = pl.CostEstimate(
        flops=2 * Bp * (nzp * nhp + nhp * nhp + nhp * ninp),
        transcendentals=Bp * ninp,
        bytes_accessed=sum(int(a.nbytes) for a in operands) + Bp * ninp * out_itemsize,
    )

    def run(weight_pipeline_mode):
        def wspec(shape):
            if weight_pipeline_mode is None:
                return pl.BlockSpec(shape, lambda i: (0, 0))
            return pl.BlockSpec(shape, lambda i: (0, 0),
                                pipeline_mode=weight_pipeline_mode)

        return pl.pallas_call(
            decoder_kernel,
            out_shape=jax.ShapeDtypeStruct((Bp, ninp), out_dtype),
            grid_spec=pltpu.PrefetchScalarGridSpec(
                num_scalar_prefetch=0,
                grid=(Bp // TB,),
                in_specs=[
                    pl.BlockSpec((TB, nzp), lambda i: (i, 0)),   # z: batch-tiled
                    wspec((nzp, nhp)),                           # weights: resident
                    wspec((1, nhp)),
                    wspec((nhp, nhp)),
                    wspec((1, nhp)),
                    wspec((nhp, ninp)),
                    wspec((1, ninp)),
                ],
                out_specs=pl.BlockSpec((TB, ninp), lambda i: (i, 0)),
            ),
            compiler_params=pltpu.CompilerParams(
                dimension_semantics=("parallel",),   # shard grid over v7x's 2 TCs
                vmem_limit_bytes=vmem_limit,
            ),
            cost_estimate=cost,
        )(*operands)

    try:
        # Invariant operands: no double buffering needed -> halve their VMEM.
        flat = run(pl.Buffered(1))
    except Exception:
        # Older jax without per-BlockSpec pipeline_mode support.
        flat = run(None)

    # Slice off batch / lane padding; nn.Unflatten(1, (1, imgsize, imgsize)).
    return flat[:B, :nin].reshape(B, 1, imgsize, imgsize)


# ----------------------------------------------------------------------------
# Plain-JAX reference (unfolded BN, unpadded) for verification
# ----------------------------------------------------------------------------
def decoder_reference(z, params):
    h = z @ params["w1"] + params["b1"]
    h = jnp.where(h > 0, h, NEG_SLOPE * h)
    h = h @ params["w2"] + params["b2"]
    h = (h - params["mean"]) * lax.rsqrt(params["var"] + BN_EPS) * params["gamma"] + params["beta"]
    h = jnp.where(h > 0, h, NEG_SLOPE * h)
    h = h @ params["w3"] + params["b3"]
    return jnp.tanh(h)


if __name__ == "__main__":
    # Small shapes consistent with Decoder(imgsize, nz, nh)
    imgsize = 16
    nz = 4
    nh = 32
    nin = imgsize * imgsize
    batch = 8

    key = jax.random.PRNGKey(0)
    k_z, k_p, k_z2 = jax.random.split(key, 3)

    z = jax.random.normal(k_z, (batch, nz), jnp.float32)
    params = init_decoder_params(k_p, nz, nh, nin)
    ref = decoder_reference(z, params).reshape(batch, 1, imgsize, imgsize)

    # --- f32 matmul operands: tight check ---
    prep_f32 = prepare_decoder_params(params, use_bf16=False)
    imgs = jax.block_until_ready(decoder_forward(z, prep_f32, imgsize))
    assert imgs.shape == (batch, 1, imgsize, imgsize), imgs.shape
    assert imgs.dtype == jnp.float32
    if not jnp.allclose(imgs, ref, atol=1e-5, rtol=1e-5):
        raise AssertionError("Pallas kernel output mismatch vs JAX reference (f32)")

    # --- default path: bf16 matmul operands, f32 accumulate; prepared once & reused ---
    prep = prepare_decoder_params(params)           # use_bf16=True default
    imgs_bf = jax.block_until_ready(decoder_forward(z, prep, imgsize))
    if not jnp.allclose(imgs_bf, ref, atol=5e-2, rtol=0):
        raise AssertionError("Pallas kernel output mismatch vs JAX reference (bf16 weights)")

    # --- multi-step grid + ragged batch (exercises batch tiling / padding) ---
    batch2 = 37
    z2 = jax.random.normal(k_z2, (batch2, nz), jnp.float32)
    ref2 = decoder_reference(z2, params).reshape(batch2, 1, imgsize, imgsize)
    imgs2 = jax.block_until_ready(decoder_forward(z2, prep, imgsize, batch_tile=16))
    if not jnp.allclose(imgs2, ref2, atol=5e-2, rtol=0):
        raise AssertionError("Pallas kernel output mismatch vs JAX reference (tiled bf16)")

    # --- bf16 output stream (halves the dominant HBM write; biggest win on v5e) ---
    imgs_bf_out = jax.block_until_ready(
        decoder_forward(z, prep, imgsize, out_dtype=jnp.bfloat16))
    assert imgs_bf_out.dtype == jnp.bfloat16
    if not jnp.allclose(imgs_bf_out.astype(jnp.float32), ref, atol=5e-2, rtol=0):
        raise AssertionError("Pallas kernel output mismatch vs JAX reference (bf16 output)")

    print("KERNEL_OK")
</pallas_src>

<mosaic_0001>
module attributes {stable_mosaic.version = 11 : i64} {
  func.func @decoder_kernel(%arg0: i32, %arg1: memref<16x8xf32, #tpu.memory_space<vmem>>, %arg2: memref<8x128xf32, #tpu.memory_space<vmem>>, %arg3: memref<1x128xf32, #tpu.memory_space<vmem>>, %arg4: memref<128x128xf32, #tpu.memory_space<vmem>>, %arg5: memref<1x128xf32, #tpu.memory_space<vmem>>, %arg6: memref<128x256xf32, #tpu.memory_space<vmem>>, %arg7: memref<1x256xf32, #tpu.memory_space<vmem>>, %arg8: memref<16x256xf32, #tpu.memory_space<vmem>>) attributes {dimension_semantics = [#tpu.dimension_semantics<parallel>], iteration_bounds = array<i64: 1>, scalar_prefetch = 0 : i64, scratch_operands = 0 : i64, tpu.core_type = #tpu.core_type<tc>, window_params = [{transform_indices = @transform_0, window_bounds = array<i64: 16, 8>}, {pipeline_mode = #tpu.pipeline_mode<synchronous>, transform_indices = @transform_1, window_bounds = array<i64: 8, 128>}, {pipeline_mode = #tpu.pipeline_mode<synchronous>, transform_indices = @transform_2, window_bounds = array<i64: 1, 128>}, {pipeline_mode = #tpu.pipeline_mode<synchronous>, transform_indices = @transform_3, window_bounds = array<i64: 128, 128>}, {pipeline_mode = #tpu.pipeline_mode<synchronous>, transform_indices = @transform_4, window_bounds = array<i64: 1, 128>}, {pipeline_mode = #tpu.pipeline_mode<synchronous>, transform_indices = @transform_5, window_bounds = array<i64: 128, 256>}, {pipeline_mode = #tpu.pipeline_mode<synchronous>, transform_indices = @transform_6, window_bounds = array<i64: 1, 256>}, {transform_indices = @transform_7, window_bounds = array<i64: 16, 256>}]} {
    %c0 = arith.constant 0 : index
    %c0_0 = arith.constant 0 : index
    %0 = vector.load %arg1[%c0, %c0_0] : memref<16x8xf32, #tpu.memory_space<vmem>>, vector<16x8xf32>
    %c0_1 = arith.constant 0 : index
    %c0_2 = arith.constant 0 : index
    %1 = vector.load %arg2[%c0_1, %c0_2] : memref<8x128xf32, #tpu.memory_space<vmem>>, vector<8x128xf32>
    %cst = arith.constant dense<0.000000e+00> : vector<16x128xf32>
    %2 = tpu.matmul %0, %1, %cst {dimension_numbers = #tpu.dot_dimension_numbers<[1], [0], [0], [1], [0, 0, 1, 1], [], []>} : vector<16x8xf32>, vector<8x128xf32>, vector<16x128xf32> -> vector<16x128xf32>
    %c0_3 = arith.constant 0 : index
    %c0_4 = arith.constant 0 : index
    %3 = vector.load %arg3[%c0_3, %c0_4] : memref<1x128xf32, #tpu.memory_space<vmem>>, vector<1x128xf32>
    %4 = vector.broadcast %3 : vector<1x128xf32> to vector<16x128xf32>
    %5 = arith.addf %2, %4 : vector<16x128xf32>
    %cst_5 = arith.constant 0.000000e+00 : f32
    %6 = vector.broadcast %cst_5 : f32 to vector<16x128xf32>
    %7 = arith.cmpf ogt, %5, %6 : vector<16x128xf32>
    %cst_6 = arith.constant 0.00999999977 : f32
    %8 = vector.broadcast %cst_6 : f32 to vector<16x128xf32>
    %9 = arith.mulf %8, %5 : vector<16x128xf32>
    %10 = arith.select %7, %5, %9 : vector<16x128xi1>, vector<16x128xf32>
    %c0_7 = arith.constant 0 : index
    %c0_8 = arith.constant 0 : index
    %11 = vector.load %arg4[%c0_7, %c0_8] : memref<128x128xf32, #tpu.memory_space<vmem>>, vector<128x128xf32>
    %cst_9 = arith.constant dense<0.000000e+00> : vector<16x128xf32>
    %12 = tpu.matmul %10, %11, %cst_9 {dimension_numbers = #tpu.dot_dimension_numbers<[1], [0], [0], [1], [0, 0, 1, 1], [], []>} : vector<16x128xf32>, vector<128x128xf32>, vector<16x128xf32> -> vector<16x128xf32>
    %c0_10 = arith.constant 0 : index
    %c0_11 = arith.constant 0 : index
    %13 = vector.load %arg5[%c0_10, %c0_11] : memref<1x128xf32, #tpu.memory_space<vmem>>, vector<1x128xf32>
    %14 = vector.broadcast %13 : vector<1x128xf32> to vector<16x128xf32>
    %15 = arith.addf %12, %14 : vector<16x128xf32>
    %cst_12 = arith.constant 0.000000e+00 : f32
    %16 = vector.broadcast %cst_12 : f32 to vector<16x128xf32>
    %17 = arith.cmpf ogt, %15, %16 : vector<16x128xf32>
    %cst_13 = arith.constant 0.00999999977 : f32
    %18 = vector.broadcast %cst_13 : f32 to vector<16x128xf32>
    %19 = arith.mulf %18, %15 : vector<16x128xf32>
    %20 = arith.select %17, %15, %19 : vector<16x128xi1>, vector<16x128xf32>
    %c0_14 = arith.constant 0 : index
    %c0_15 = arith.constant 0 : index
    %21 = vector.load %arg6[%c0_14, %c0_15] : memref<128x256xf32, #tpu.memory_space<vmem>>, vector<128x256xf32>
    %cst_16 = arith.constant dense<0.000000e+00> : vector<16x256xf32>
    %22 = tpu.matmul %20, %21, %cst_16 {dimension_numbers = #tpu.dot_dimension_numbers<[1], [0], [0], [1], [0, 0, 1, 1], [], []>} : vector<16x128xf32>, vector<128x256xf32>, vector<16x256xf32> -> vector<16x256xf32>
    %c0_17 = arith.constant 0 : index
    %c0_18 = arith.constant 0 : index
    %23 = vector.load %arg7[%c0_17, %c0_18] : memref<1x256xf32, #tpu.memory_space<vmem>>, vector<1x256xf32>
    %24 = vector.broadcast %23 : vector<1x256xf32> to vector<16x256xf32>
    %25 = arith.addf %22, %24 : vector<16x256xf32>
    %26 = math.tanh %25 : vector<16x256xf32>
    %c0_19 = arith.constant 0 : index
    %c0_20 = arith.constant 0 : index
    %27 = vector.load %arg8[%c0_19, %c0_20] : memref<16x256xf32, #tpu.memory_space<vmem>>, vector<16x256xf32>
    tpu.vector_store %arg8[%c0_19, %c0_20], %26 {strides = array<i32>} : memref<16x256xf32, #tpu.memory_space<vmem>>, vector<16x256xf32>,
    return
  }
  func.func @transform_0(%arg0: i32) -> (i32, i32) {
    %c0_i32 = arith.constant 0 : i32
    %c0_i32_0 = arith.constant 0 : i32
    return %arg0, %c0_i32 : i32, i32
  }
  func.func @transform_1(%arg0: i32) -> (i32, i32) {
    %c0_i32 = arith.constant 0 : i32
    %c0_i32_0 = arith.constant 0 : i32
    %c0_i32_1 = arith.constant 0 : i32
    return %c0_i32, %c0_i32_0 : i32, i32
  }
  func.func @transform_2(%arg0: i32) -> (i32, i32) {
    %c0_i32 = arith.constant 0 : i32
    %c0_i32_0 = arith.constant 0 : i32
    %c0_i32_1 = arith.constant 0 : i32
    return %c0_i32, %c0_i32_0 : i32, i32
  }
  func.func @transform_3(%arg0: i32) -> (i32, i32) {
    %c0_i32 = arith.constant 0 : i32
    %c0_i32_0 = arith.constant 0 : i32
    %c0_i32_1 = arith.constant 0 : i32
    return %c0_i32, %c0_i32_0 : i32, i32
  }
  func.func @transform_4(%arg0: i32) -> (i32, i32) {
    %c0_i32 = arith.constant 0 : i32
    %c0_i32_0 = arith.constant 0 : i32
    %c0_i32_1 = arith.constant 0 : i32
    return %c0_i32, %c0_i32_0 : i32, i32
  }
  func.func @transform_5(%arg0: i32) -> (i32, i32) {
    %c0_i32 = arith.constant 0 : i32
    %c0_i32_0 = arith.constant 0 : i32
    %c0_i32_1 = arith.constant 0 : i32
    return %c0_i32, %c0_i32_0 : i32, i32
  }
  func.func @transform_6(%arg0: i32) -> (i32, i32) {
    %c0_i32 = arith.constant 0 : i32
    %c0_i32_0 = arith.constant 0 : i32
    %c0_i32_1 = arith.constant 0 : i32
    return %c0_i32, %c0_i32_0 : i32, i32
  }
  func.func @transform_7(%arg0: i32) -> (i32, i32) {
    %c0_i32 = arith.constant 0 : i32
    %c0_i32_0 = arith.constant 0 : i32
    return %arg0, %c0_i32 : i32, i32
  }
}

module attributes {stable_mosaic.version = 11 : i64} {
  func.func @decoder_kernel(%arg0: i32, %arg1: memref<16x8xf32, #tpu.memory_space<vmem>>, %arg2: memref<8x128xf32, #tpu.memory_space<vmem>>, %arg3: memref<1x128xf32, #tpu.memory_space<vmem>>, %arg4: memref<128x128xf32, #tpu.memory_space<vmem>>, %arg5: memref<1x128xf32, #tpu.memory_space<vmem>>, %arg6: memref<128x256xf32, #tpu.memory_space<vmem>>, %arg7: memref<1x256xf32, #tpu.memory_space<vmem>>, %arg8: memref<16x256xf32, #tpu.memory_space<vmem>>) attributes {dimension_semantics = [#tpu.dimension_semantics<parallel>], iteration_bounds = array<i64: 1>, scalar_prefetch = 0 : i64, scratch_operands = 0 : i64, tpu.core_type = #tpu.core_type<tc>, window_params = [{transform_indices = @transform_0, window_bounds = array<i64: 16, 8>}, {pipeline_mode = #tpu.pipeline_mode<synchronous>, transform_indices = @transform_1, window_bounds = array<i64: 8, 128>}, {pipeline_mode = #tpu.pipeline_mode<synchronous>, transform_indices = @transform_2, window_bounds = array<i64: 1, 128>}, {pipeline_mode = #tpu.pipeline_mode<synchronous>, transform_indices = @transform_3, window_bounds = array<i64: 128, 128>}, {pipeline_mode = #tpu.pipeline_mode<synchronous>, transform_indices = @transform_4, window_bounds = array<i64: 1, 128>}, {pipeline_mode = #tpu.pipeline_mode<synchronous>, transform_indices = @transform_5, window_bounds = array<i64: 128, 256>}, {pipeline_mode = #tpu.pipeline_mode<synchronous>, transform_indices = @transform_6, window_bounds = array<i64: 1, 256>}, {transform_indices = @transform_7, window_bounds = array<i64: 16, 256>}]} {
    %c0 = arith.constant 0 : index
    %c0_0 = arith.constant 0 : index
    %0 = vector.load %arg1[%c0, %c0_0] : memref<16x8xf32, #tpu.memory_space<vmem>>, vector<16x8xf32>
    %c0_1 = arith.constant 0 : index
    %c0_2 = arith.constant 0 : index
    %1 = vector.load %arg2[%c0_1, %c0_2] : memref<8x128xf32, #tpu.memory_space<vmem>>, vector<8x128xf32>
    %cst = arith.constant dense<0.000000e+00> : vector<16x128xf32>
    %2 = tpu.matmul %0, %1, %cst {dimension_numbers = #tpu.dot_dimension_numbers<[1], [0], [0], [1], [0, 0, 1, 1], [], []>} : vector<16x8xf32>, vector<8x128xf32>, vector<16x128xf32> -> vector<16x128xf32>
    %c0_3 = arith.constant 0 : index
    %c0_4 = arith.constant 0 : index
    %3 = vector.load %arg3[%c0_3, %c0_4] : memref<1x128xf32, #tpu.memory_space<vmem>>, vector<1x128xf32>
    %4 = vector.broadcast %3 : vector<1x128xf32> to vector<16x128xf32>
    %5 = arith.addf %2, %4 : vector<16x128xf32>
    %cst_5 = arith.constant 0.000000e+00 : f32
    %6 = vector.broadcast %cst_5 : f32 to vector<16x128xf32>
    %7 = arith.cmpf ogt, %5, %6 : vector<16x128xf32>
    %cst_6 = arith.constant 0.00999999977 : f32
    %8 = vector.broadcast %cst_6 : f32 to vector<16x128xf32>
    %9 = arith.mulf %8, %5 : vector<16x128xf32>
    %10 = arith.select %7, %5, %9 : vector<16x128xi1>, vector<16x128xf32>
    %c0_7 = arith.constant 0 : index
    %c0_8 = arith.constant 0 : index
    %11 = vector.load %arg4[%c0_7, %c0_8] : memref<128x128xf32, #tpu.memory_space<vmem>>, vector<128x128xf32>
    %cst_9 = arith.constant dense<0.000000e+00> : vector<16x128xf32>
    %12 = tpu.matmul %10, %11, %cst_9 {dimension_numbers = #tpu.dot_dimension_numbers<[1], [0], [0], [1], [0, 0, 1, 1], [], []>} : vector<16x128xf32>, vector<128x128xf32>, vector<16x128xf32> -> vector<16x128xf32>
    %c0_10 = arith.constant 0 : index
    %c0_11 = arith.constant 0 : index
    %13 = vector.load %arg5[%c0_10, %c0_11] : memref<1x128xf32, #tpu.memory_space<vmem>>, vector<1x128xf32>
    %14 = vector.broadcast %13 : vector<1x128xf32> to vector<16x128xf32>
    %15 = arith.addf %12, %14 : vector<16x128xf32>
    %cst_12 = arith.constant 0.000000e+00 : f32
    %16 = vector.broadcast %cst_12 : f32 to vector<16x128xf32>
    %17 = arith.cmpf ogt, %15, %16 : vector<16x128xf32>
    %cst_13 = arith.constant 0.00999999977 : f32
    %18 = vector.broadcast %cst_13 : f32 to vector<16x128xf32>
    %19 = arith.mulf %18, %15 : vector<16x128xf32>
    %20 = arith.select %17, %15, %19 : vector<16x128xi1>, vector<16x128xf32>
    %c0_14 = arith.constant 0 : index
    %c0_15 = arith.constant 0 : index
    %21 = vector.load %arg6[%c0_14, %c0_15] : memref<128x256xf32, #tpu.memory_space<vmem>>, vector<128x256xf32>
    %cst_16 = arith.constant dense<0.000000e+00> : vector<16x256xf32>
    %22 = tpu.matmul %20, %21, %cst_16 {dimension_numbers = #tpu.dot_dimension_numbers<[1], [0], [0], [1], [0, 0, 1, 1], [], []>} : vector<16x128xf32>, vector<128x256xf32>, vector<16x256xf32> -> vector<16x256xf32>
    %c0_17 = arith.constant 0 : index
    %c0_18 = arith.constant 0 : index
    %23 = vector.load %arg7[%c0_17, %c0_18] : memref<1x256xf32, #tpu.memory_space<vmem>>, vector<1x256xf32>
    %24 = vector.broadcast %23 : vector<1x256xf32> to vector<16x256xf32>
    %25 = arith.addf %22, %24 : vector<16x256xf32>
    %26 = math.tanh %25 : vector<16x256xf32>
    %c0_19 = arith.constant 0 : index
    %c0_20 = arith.constant 0 : index
    %27 = vector.load %arg8[%c0_19, %c0_20] : memref<16x256xf32, #tpu.memory_space<vmem>>, vector<16x256xf32>
    tpu.vector_store %arg8[%c0_19, %c0_20], %26 {strides = array<i32>} : memref<16x256xf32, #tpu.memory_space<vmem>>, vector<16x256xf32>,
    return
  }
  func.func @transform_0(%arg0: i32) -> (i32, i32) {
    %c0_i32 = arith.constant 0 : i32
    %c0_i32_0 = arith.constant 0 : i32
    return %arg0, %c0_i32 : i32, i32
  }
  func.func @transform_1(%arg0: i32) -> (i32, i32) {
    %c0_i32 = arith.constant 0 : i32
    %c0_i32_0 = arith.constant 0 : i32
    %c0_i32_1 = arith.constant 0 : i32
    return %c0_i32, %c0_i32_0 : i32, i32
  }
  func.func @transform_2(%arg0: i32) -> (i32, i32) {
    %c0_i32 = arith.constant 0 : i32
    %c0_i32_0 = arith.constant 0 : i32
    %c0_i32_1 = arith.constant 0 : i32
    return %c0_i32, %c0_i32_0 : i32, i32
  }
  func.func @transform_3(%arg0: i32) -> (i32, i32) {
    %c0_i32 = arith.constant 0 : i32
    %c0_i32_0 = arith.constant 0 : i32
    %c0_i32_1 = arith.constant 0 : i32
    return %c0_i32, %c0_i32_0 : i32, i32
  }
  func.func @transform_4(%arg0: i32) -> (i32, i32) {
    %c0_i32 = arith.constant 0 : i32
    %c0_i32_0 = arith.constant 0 : i32
    %c0_i32_1 = arith.constant 0 : i32
    return %c0_i32, %c0_i32_0 : i32, i32
  }
  func.func @transform_5(%arg0: i32) -> (i32, i32) {
    %c0_i32 = arith.constant 0 : i32
    %c0_i32_0 = arith.constant 0 : i32
    %c0_i32_1 = arith.constant 0 : i32
    return %c0_i32, %c0_i32_0 : i32, i32
  }
  func.func @transform_6(%arg0: i32) -> (i32, i32) {
    %c0_i32 = arith.constant 0 : i32
    %c0_i32_0 = arith.constant 0 : i32
    %c0_i32_1 = arith.constant 0 : i32
    return %c0_i32, %c0_i32_0 : i32, i32
  }
  func.func @transform_7(%arg0: i32) -> (i32, i32) {
    %c0_i32 = arith.constant 0 : i32
    %c0_i32_0 = arith.constant 0 : i32
    return %arg0, %c0_i32 : i32, i32
  }
}

</mosaic_0001>

<llo_original>
// kernel: tpu_custom_call.1
$region0: #{tpu_custom_call.1}
  #allocation0 [shape = 'u32[]', space=smem, size = 0x4, offset = 0x4, fixed_abs, tag = 'smem constant byte address 0x4 - core index']
  #allocation1 [shape = 'u32[144,128]{1,0:T(1,128)}', space=vmem, size = 0x12000, scoped, tag = 'internal scratch']
  %s0 = inlined_call_operand.vmem [shape: f32[16,8], index: 0, kind: input, shape index: {}]
  %s1 = inlined_call_operand.vmem [shape: f32[8,128], index: 1, kind: input, shape index: {}]
  %s2 = inlined_call_operand.vmem [shape: f32[1,128], index: 2, kind: input, shape index: {}]
  %s3 = inlined_call_operand.hbm [shape: f32[128,128], index: 3, kind: input, shape index: {}]
  %s4 = inlined_call_operand.vmem [shape: f32[1,128], index: 4, kind: input, shape index: {}]
  %s5 = inlined_call_operand.hbm [shape: f32[128,256], index: 5, kind: input, shape index: {}]
  %s6 = inlined_call_operand.vmem [shape: f32[1,256], index: 6, kind: input, shape index: {}]
  %s7 = inlined_call_operand.hbm [shape: f32[16,256], index: 7, kind: output, shape index: {}]
  %s8 = sld [smem:[#allocation0]]
  $region46: #{tpu_custom_call.1} parent=0
    _
  %s10 = ssub.s32 1, %s8
  %s11 = scalar_select 0, %s10, %s8
  $region1: #{tpu_custom_call.1} parent=0
    #allocation2 [shape = 'u8[65536]{0}', space=vmem, size = 0x10000, scoped, tag = 'input window, operand 3, single buffered']
    #allocation3 [shape = 's32[1]{0}', space=sflag, size = 0x4, scoped, tag = 'scoped memory for tpu_custom_call.1']
    #allocation4 [shape = 's32[1]{0}', space=sflag, size = 0x4, scoped, tag = 'scoped memory for tpu_custom_call.1']
    #allocation5 [shape = 'u8[131072]{0}', space=vmem, size = 0x20000, scoped, tag = 'input window, operand 5, single buffered']
    #allocation6 [shape = 's32[1]{0}', space=sflag, size = 0x4, scoped, tag = 'scoped memory for tpu_custom_call.1']
    #allocation7 [shape = 'u8[16384]{0}', space=vmem, size = 0x4000, scoped, tag = 'output window, operand 0, single buffered']
    %12 = vsyncpa [#allocation3], 0
    %13 = vsyncpa [#allocation6], 0
    %14 = vsyncpa [#allocation4], 0
    // Predicated region
    $region2: #{tpu_custom_call.1} parent=1 // pred_check
      _
    $region3: #{tpu_custom_call.1} parent=1 // pred_check_branch
      %16 = sbr.rel (0) target = $region5
    $region4: #{tpu_custom_call.1} parent=1 // pred_region
      _
    $region5: #{tpu_custom_call.1} parent=1 // pred_fallthru
      _
    // Predicated region
    $region6: #{tpu_custom_call.1} parent=1 // pred_check
      _
    $region7: #{tpu_custom_call.1} parent=1 // pred_check_branch
      %18 = sbr.rel (0) target = $region9
    $region8: #{tpu_custom_call.1} parent=1 // pred_region
      _
    $region9: #{tpu_custom_call.1} parent=1 // pred_fallthru
      _
    // Predicated region
    $region10: #{tpu_custom_call.1} parent=1 // pred_check
      _
    $region11: #{tpu_custom_call.1} parent=1 // pred_check_branch
      %20 = sbr.rel (0) target = $region13
    $region12: #{tpu_custom_call.1} parent=1 // pred_region
      _
    $region13: #{tpu_custom_call.1} parent=1 // pred_fallthru
      _
    // Predicated region
    $region14: #{tpu_custom_call.1} parent=1 // pred_check
      _
    $region15: #{tpu_custom_call.1} parent=1 // pred_check_branch
      %22 = sbr.rel (0) target = $region17
    $region16: #{tpu_custom_call.1} parent=1 // pred_region
      %s24 = ssub.s32 2048, 2048
      %25 = vsyncadd [#allocation3], %s24
      %s26 = sshll.u32 [#allocation2], 4
      %s27 = int_to_ptr.vmem [resolvable:$true] %s26
      %32 = dma.hbm_to_vmem [thread:$0]  %s3, 2048, %s27, [#allocation3], 128, 128, 8
    $region17: #{tpu_custom_call.1} parent=1 // pred_fallthru
      _
    // Predicated region
    $region18: #{tpu_custom_call.1} parent=1 // pred_check
      _
    $region19: #{tpu_custom_call.1} parent=1 // pred_check_branch
      %34 = sbr.rel (0) target = $region21
    $region20: #{tpu_custom_call.1} parent=1 // pred_region
      _
    $region21: #{tpu_custom_call.1} parent=1 // pred_fallthru
      _
    // Predicated region
    $region22: #{tpu_custom_call.1} parent=1 // pred_check
      _
    $region23: #{tpu_custom_call.1} parent=1 // pred_check_branch
      %36 = sbr.rel (0) target = $region25
    $region24: #{tpu_custom_call.1} parent=1 // pred_region
      %s38 = ssub.s32 4096, 4096
      %39 = vsyncadd [#allocation6], %s38
      %s40 = sshll.u32 [#allocation5], 4
      %s41 = int_to_ptr.vmem [resolvable:$true] %s40
      %46 = dma.hbm_to_vmem [thread:$0]  %s5, 4096, %s41, [#allocation6], 256, 256, 16
    $region25: #{tpu_custom_call.1} parent=1 // pred_fallthru
      _
    // Predicated region
    $region26: #{tpu_custom_call.1} parent=1 // pred_check
      _
    $region27: #{tpu_custom_call.1} parent=1 // pred_check_branch
      %48 = sbr.rel (0) target = $region29
    $region28: #{tpu_custom_call.1} parent=1 // pred_region
      _
    $region29: #{tpu_custom_call.1} parent=1 // pred_fallthru
      _
    // Predicated region
    $region30: #{tpu_custom_call.1} parent=1 // pred_check
      _
    $region31: #{tpu_custom_call.1} parent=1 // pred_check_branch
      %50 = sbr.rel (0) target = $region33
    $region32: #{tpu_custom_call.1} parent=1 // pred_region
      %51 = dma.done [#allocation3], 2048
    $region33: #{tpu_custom_call.1} parent=1 // pred_fallthru
      _
    // Predicated region
    $region34: #{tpu_custom_call.1} parent=1 // pred_check
      _
    $region35: #{tpu_custom_call.1} parent=1 // pred_check_branch
      %53 = sbr.rel (0) target = $region37
    $region36: #{tpu_custom_call.1} parent=1 // pred_region
      %54 = dma.done [#allocation6], 4096
    $region37: #{tpu_custom_call.1} parent=1 // pred_fallthru
      _
    %v55 = vld [vmem:[%s0] sm:$0xff]
    %v56 = vld [vmem:[%s0 + $0x8] sm:$0xff]
    %v57 = vld [vmem:[%s1] sm:$0xff]
    %v58 = vld [vmem:[%s2] sm:$0x1]
    %v60 = vlaneseq
    %v61 = vshrl.u32 %v60, 7
    %v62 = vsub.s32 0, %v61
    %v63 = vrot.slane %v58, %v62
    %vm65 = vcmask 64512
    %v67 = vsel %vm65, %v55, 0
    %v70 = vsel %vm65, %v56, 0
    %72 = vmatprep.subr.mxu0 0.0
    %73 = vmatpush1.msra.mxu0 %v57
    %74 = vmatprep.subr.mxu0 0.0
    %75 = vmatpush1.msra.mxu0 0.0
    %76 = vmatprep.subr.mxu0 0.0
    %77 = vmatpush1.msra.mxu0 0.0
    %78 = vmatprep.subr.mxu0 0.0
    %79 = vmatpush1.msra.mxu0 0.0
    %80 = vmatprep.subr.mxu0 0.0
    %81 = vmatpush1.msra.mxu0 0.0
    %82 = vmatprep.subr.mxu0 0.0
    %83 = vmatpush1.msra.mxu0 0.0
    %84 = vmatprep.subr.mxu0 0.0
    %85 = vmatpush1.msra.mxu0 0.0
    %86 = vmatprep.subr.mxu0 0.0
    %87 = vmatpush1.msra.mxu0 0.0
    %88 = vmatprep.subr.mxu0 0.0
    %89 = vmatpush1.msra.mxu0 0.0
    %90 = vmatprep.subr.mxu0 0.0
    %91 = vmatpush1.msra.mxu0 0.0
    %92 = vmatprep.subr.mxu0 0.0
    %93 = vmatpush1.msra.mxu0 0.0
    %94 = vmatprep.subr.mxu0 0.0
    %95 = vmatpush1.msra.mxu0 0.0
    %96 = vmatprep.subr.mxu0 0.0
    %97 = vmatpush1.msra.mxu0 0.0
    %98 = vmatprep.subr.mxu0 0.0
    %99 = vmatpush1.msra.mxu0 0.0
    %100 = vmatprep.subr.mxu0 0.0
    %101 = vmatpush1.msra.mxu0 0.0
    %102 = vmatprep.subr.mxu0 0.0
    %103 = vmatpush1.msra.mxu0 0.0
    %104 = vmatprep.subr.mxu0 0.0
    %105 = vmatpush1.msra.mxu0 0.0
    %106 = vmatprep.subr.mxu0 0.0
    %107 = vmatpush1.msra.mxu0 0.0
    %108 = vmatprep.subr.mxu0 0.0
    %109 = vmatpush1.msra.mxu0 0.0
    %110 = vmatprep.subr.mxu0 0.0
    %111 = vmatpush1.msra.mxu0 0.0
    %112 = vmatprep.subr.mxu0 0.0
    %113 = vmatpush1.msra.mxu0 0.0
    %114 = vmatprep.subr.mxu0 0.0
    %115 = vmatpush1.msra.mxu0 0.0
    %116 = vmatprep.subr.mxu0 0.0
    %117 = vmatpush1.msra.mxu0 0.0
    %118 = vmatprep.subr.mxu0 0.0
    %119 = vmatpush1.msra.mxu0 0.0
    %120 = vmatprep.subr.mxu0 0.0
    %121 = vmatpush1.msra.mxu0 0.0
    %122 = vmatprep.subr.mxu0 0.0
    %123 = vmatpush1.msra.mxu0 0.0
    %124 = vmatprep.subr.mxu0 0.0
    %125 = vmatpush1.msra.mxu0 0.0
    %126 = vmatprep.subr.mxu0 0.0
    %127 = vmatpush1.msra.mxu0 0.0
    %128 = vmatprep.subr.mxu0 0.0
    %129 = vmatpush1.msra.mxu0 0.0
    %130 = vmatprep.subr.mxu0 0.0
    %131 = vmatpush1.msra.mxu0 0.0
    %132 = vmatprep.subr.mxu0 0.0
    %133 = vmatpush1.msra.mxu0 0.0
    %134 = vmatprep.subr.mxu0 0.0
    %135 = vmatpush1.msra.mxu0 0.0
    %136 = vmatprep.mubr.f32.mxu0 0.0
    %137 = vmatmul.mubr.f32.gmra.mrb[0].mxu0 %v67
    %v138 = vpop.f32.mrb[0].mxu0
    %v139 = vadd.f32 %v63, %v138
    %v140 = vpop.f32.mrb[0].mxu0
    %141 = vmatprep.mubr.f32.mxu0 0.0
    %142 = vmatmul.mubr.f32.gmra.mrb[0].mxu0 %v70
    %v143 = vpop.f32.mrb[0].mxu0
    %v144 = vadd.f32 %v63, %v143
    %v145 = vpop.f32.mrb[0].mxu0
    %146 = vdwg.mxu0
    %vm147 = vcmp.gt.f32.partialorder %v139, 0.0
    %vm148 = vcmp.gt.f32.partialorder %v144, 0.0
    %v149 = vmul.f32 %v139, 0.01
    %v150 = vmul.f32 %v144, 0.01
    %v151 = vsel %vm147, %v139, %v149
    %v152 = vsel %vm148, %v144, %v150
    %v153 = vld [vmem:[#allocation2] sm:$0xff]
    %v154 = vld [vmem:[#allocation2 + $0x8] sm:$0xff]
    %v155 = vld [vmem:[#allocation2 + $0x10] sm:$0xff]
    %v156 = vld [vmem:[#allocation2 + $0x18] sm:$0xff]
    %v157 = vld [vmem:[#allocation2 + $0x20] sm:$0xff]
    %v158 = vld [vmem:[#allocation2 + $0x28] sm:$0xff]
    %v159 = vld [vmem:[#allocation2 + $0x30] sm:$0xff]
    %v160 = vld [vmem:[#allocation2 + $0x38] sm:$0xff]
    %v161 = vld [vmem:[#allocation2 + $0x40] sm:$0xff]
    %v162 = vld [vmem:[#allocation2 + $0x48] sm:$0xff]
    %v163 = vld [vmem:[#allocation2 + $0x50] sm:$0xff]
    %v164 = vld [vmem:[#allocation2 + $0x58] sm:$0xff]
    %v165 = vld [vmem:[#allocation2 + $0x60] sm:$0xff]
    %v166 = vld [vmem:[#allocation2 + $0x68] sm:$0xff]
    %v167 = vld [vmem:[#allocation2 + $0x70] sm:$0xff]
    %v168 = vld [vmem:[#allocation2 + $0x78] sm:$0xff]
    %v169 = vld [vmem:[%s4] sm:$0x1]
    %v171 = vlaneseq
    %v172 = vshrl.u32 %v171, 7
    %v173 = vsub.s32 0, %v172
    %v174 = vrot.slane %v169, %v173
    %176 = vmatprep.subr.mxu0 0.0
    %177 = vmatpush1.msra.mxu0 %v153
    %178 = vmatprep.subr.mxu0 0.0
    %179 = vmatpush1.msra.mxu0 %v154
    %180 = vmatprep.subr.mxu0 0.0
    %181 = vmatpush1.msra.mxu0 %v155
    %182 = vmatprep.subr.mxu0 0.0
    %183 = vmatpush1.msra.mxu0 %v156
    %184 = vmatprep.subr.mxu0 0.0
    %185 = vmatpush1.msra.mxu0 %v157
    %186 = vmatprep.subr.mxu0 0.0
    %187 = vmatpush1.msra.mxu0 %v158
    %188 = vmatprep.subr.mxu0 0.0
    %189 = vmatpush1.msra.mxu0 %v159
    %190 = vmatprep.subr.mxu0 0.0
    %191 = vmatpush1.msra.mxu0 %v160
    %192 = vmatprep.subr.mxu0 0.0
    %193 = vmatpush1.msra.mxu0 %v161
    %194 = vmatprep.subr.mxu0 0.0
    %195 = vmatpush1.msra.mxu0 %v162
    %196 = vmatprep.subr.mxu0 0.0
    %197 = vmatpush1.msra.mxu0 %v163
    %198 = vmatprep.subr.mxu0 0.0
    %199 = vmatpush1.msra.mxu0 %v164
    %200 = vmatprep.subr.mxu0 0.0
    %201 = vmatpush1.msra.mxu0 %v165
    %202 = vmatprep.subr.mxu0 0.0
    %203 = vmatpush1.msra.mxu0 %v166
    %204 = vmatprep.subr.mxu0 0.0
    %205 = vmatpush1.msra.mxu0 %v167
    %206 = vmatprep.subr.mxu0 0.0
    %207 = vmatpush1.msra.mxu0 %v168
    %208 = vmatprep.subr.mxu0 0.0
    %209 = vmatpush1.msra.mxu0 0.0
    %210 = vmatprep.subr.mxu0 0.0
    %211 = vmatpush1.msra.mxu0 0.0
    %212 = vmatprep.subr.mxu0 0.0
    %213 = vmatpush1.msra.mxu0 0.0
    %214 = vmatprep.subr.mxu0 0.0
    %215 = vmatpush1.msra.mxu0 0.0
    %216 = vmatprep.subr.mxu0 0.0
    %217 = vmatpush1.msra.mxu0 0.0
    %218 = vmatprep.subr.mxu0 0.0
    %219 = vmatpush1.msra.mxu0 0.0
    %220 = vmatprep.subr.mxu0 0.0
    %221 = vmatpush1.msra.mxu0 0.0
    %222 = vmatprep.subr.mxu0 0.0
    %223 = vmatpush1.msra.mxu0 0.0
    %224 = vmatprep.subr.mxu0 0.0
    %225 = vmatpush1.msra.mxu0 0.0
    %226 = vmatprep.subr.mxu0 0.0
    %227 = vmatpush1.msra.mxu0 0.0
    %228 = vmatprep.subr.mxu0 0.0
    %229 = vmatpush1.msra.mxu0 0.0
    %230 = vmatprep.subr.mxu0 0.0
    %231 = vmatpush1.msra.mxu0 0.0
    %232 = vmatprep.subr.mxu0 0.0
    %233 = vmatpush1.msra.mxu0 0.0
    %234 = vmatprep.subr.mxu0 0.0
    %235 = vmatpush1.msra.mxu0 0.0
    %236 = vmatprep.subr.mxu0 0.0
    %237 = vmatpush1.msra.mxu0 0.0
    %238 = vmatprep.subr.mxu0 0.0
    %239 = vmatpush1.msra.mxu0 0.0
    %240 = vmatprep.mubr.f32.mxu0 0.0
    %241 = vmatmul.mubr.f32.gmra.mrb[0].mxu0 %v151
    %v242 = vpop.f32.mrb[0].mxu0
    %v243 = vadd.f32 %v174, %v242
    %v244 = vpop.f32.mrb[0].mxu0
    %245 = vmatprep.mubr.f32.mxu0 0.0
    %246 = vmatmul.mubr.f32.gmra.mrb[0].mxu0 %v152
    %v247 = vpop.f32.mrb[0].mxu0
    %v248 = vadd.f32 %v174, %v247
    %v249 = vpop.f32.mrb[0].mxu0
    %250 = vdwg.mxu0
    %vm251 = vcmp.gt.f32.partialorder %v243, 0.0
    %vm252 = vcmp.gt.f32.partialorder %v248, 0.0
    %v253 = vmul.f32 %v243, 0.01
    %v254 = vmul.f32 %v248, 0.01
    %v255 = vsel %vm251, %v243, %v253
    %v256 = vsel %vm252, %v248, %v254
    %v257 = vld [vmem:[#allocation5] sm:$0xff]
    %v258 = vld [vmem:[#allocation5 + $0x8] sm:$0xff]
    %v259 = vld [vmem:[#allocation5 + $0x10] sm:$0xff]
    %v260 = vld [vmem:[#allocation5 + $0x18] sm:$0xff]
    %v261 = vld [vmem:[#allocation5 + $0x20] sm:$0xff]
    %v262 = vld [vmem:[#allocation5 + $0x28] sm:$0xff]
    %v263 = vld [vmem:[#allocation5 + $0x30] sm:$0xff]
    %v264 = vld [vmem:[#allocation5 + $0x38] sm:$0xff]
    %v265 = vld [vmem:[#allocation5 + $0x40] sm:$0xff]
    %v266 = vld [vmem:[#allocation5 + $0x48] sm:$0xff]
    %v267 = vld [vmem:[#allocation5 + $0x50] sm:$0xff]
    %v268 = vld [vmem:[#allocation5 + $0x58] sm:$0xff]
    %v269 = vld [vmem:[#allocation5 + $0x60] sm:$0xff]
    %v270 = vld [vmem:[#allocation5 + $0x68] sm:$0xff]
    %v271 = vld [vmem:[#allocation5 + $0x70] sm:$0xff]
    %v272 = vld [vmem:[#allocation5 + $0x78] sm:$0xff]
    %v273 = vld [vmem:[#allocation5 + $0x80] sm:$0xff]
    %v274 = vld [vmem:[#allocation5 + $0x88] sm:$0xff]
    %v275 = vld [vmem:[#allocation5 + $0x90] sm:$0xff]
    %v276 = vld [vmem:[#allocation5 + $0x98] sm:$0xff]
    %v277 = vld [vmem:[#allocation5 + $0xa0] sm:$0xff]
    %v278 = vld [vmem:[#allocation5 + $0xa8] sm:$0xff]
    %v279 = vld [vmem:[#allocation5 + $0xb0] sm:$0xff]
    %v280 = vld [vmem:[#allocation5 + $0xb8] sm:$0xff]
    %v281 = vld [vmem:[#allocation5 + $0xc0] sm:$0xff]
    %v282 = vld [vmem:[#allocation5 + $0xc8] sm:$0xff]
    %v283 = vld [vmem:[#allocation5 + $0xd0] sm:$0xff]
    %v284 = vld [vmem:[#allocation5 + $0xd8] sm:$0xff]
    %v285 = vld [vmem:[#allocation5 + $0xe0] sm:$0xff]
    %v286 = vld [vmem:[#allocation5 + $0xe8] sm:$0xff]
    %v287 = vld [vmem:[#allocation5 + $0xf0] sm:$0xff]
    %v288 = vld [vmem:[#allocation5 + $0xf8] sm:$0xff]
    %v289 = vld [vmem:[%s6] sm:$0x3]
    %v291 = vlaneseq
    %v292 = vshrl.u32 %v291, 7
    %v293 = vsub.s32 0, %v292
    %v294 = vrot.slane %v289, %v293
    %v295 = vlaneseq
    %v296 = vshrl.u32 %v295, 7
    %v297 = vsub.s32 1, %v296
    %v298 = vrot.slane %v289, %v297
    %301 = vmatprep.subr.mxu0 %v258
    %302 = vmatpush1.msra.mxu0 %v257
    %303 = vmatprep.subr.mxu0 %v260
    %304 = vmatpush1.msra.mxu0 %v259
    %305 = vmatprep.subr.mxu0 %v262
    %306 = vmatpush1.msra.mxu0 %v261
    %307 = vmatprep.subr.mxu0 %v264
    %308 = vmatpush1.msra.mxu0 %v263
    %309 = vmatprep.subr.mxu0 %v266
    %310 = vmatpush1.msra.mxu0 %v265
    %311 = vmatprep.subr.mxu0 %v268
    %312 = vmatpush1.msra.mxu0 %v267
    %313 = vmatprep.subr.mxu0 %v270
    %314 = vmatpush1.msra.mxu0 %v269
    %315 = vmatprep.subr.mxu0 %v272
    %316 = vmatpush1.msra.mxu0 %v271
    %317 = vmatprep.subr.mxu0 %v274
    %318 = vmatpush1.msra.mxu0 %v273
    %319 = vmatprep.subr.mxu0 %v276
    %320 = vmatpush1.msra.mxu0 %v275
    %321 = vmatprep.subr.mxu0 %v278
    %322 = vmatpush1.msra.mxu0 %v277
    %323 = vmatprep.subr.mxu0 %v280
    %324 = vmatpush1.msra.mxu0 %v279
    %325 = vmatprep.subr.mxu0 %v282
    %326 = vmatpush1.msra.mxu0 %v281
    %327 = vmatprep.subr.mxu0 %v284
    %328 = vmatpush1.msra.mxu0 %v283
    %329 = vmatprep.subr.mxu0 %v286
    %330 = vmatpush1.msra.mxu0 %v285
    %331 = vmatprep.subr.mxu0 %v288
    %332 = vmatpush1.msra.mxu0 %v287
    %333 = vmatprep.subr.mxu0 0.0
    %334 = vmatpush1.msra.mxu0 0.0
    %335 = vmatprep.subr.mxu0 0.0
    %336 = vmatpush1.msra.mxu0 0.0
    %337 = vmatprep.subr.mxu0 0.0
    %338 = vmatpush1.msra.mxu0 0.0
    %339 = vmatprep.subr.mxu0 0.0
    %340 = vmatpush1.msra.mxu0 0.0
    %341 = vmatprep.subr.mxu0 0.0
    %342 = vmatpush1.msra.mxu0 0.0
    %343 = vmatprep.subr.mxu0 0.0
    %344 = vmatpush1.msra.mxu0 0.0
    %345 = vmatprep.subr.mxu0 0.0
    %346 = vmatpush1.msra.mxu0 0.0
    %347 = vmatprep.subr.mxu0 0.0
    %348 = vmatpush1.msra.mxu0 0.0
    %349 = vmatprep.subr.mxu0 0.0
    %350 = vmatpush1.msra.mxu0 0.0
    %351 = vmatprep.subr.mxu0 0.0
    %352 = vmatpush1.msra.mxu0 0.0
    %353 = vmatprep.subr.mxu0 0.0
    %354 = vmatpush1.msra.mxu0 0.0
    %355 = vmatprep.subr.mxu0 0.0
    %356 = vmatpush1.msra.mxu0 0.0
    %357 = vmatprep.subr.mxu0 0.0
    %358 = vmatpush1.msra.mxu0 0.0
    %359 = vmatprep.subr.mxu0 0.0
    %360 = vmatpush1.msra.mxu0 0.0
    %361 = vmatprep.subr.mxu0 0.0
    %362 = vmatpush1.msra.mxu0 0.0
    %363 = vmatprep.subr.mxu0 0.0
    %364 = vmatpush1.msra.mxu0 0.0
    %365 = vmatprep.mubr.f32.mxu0 0.0
    %366 = vmatmul.mubr.f32.gmra.mrb[0].mxu0 %v255
    %v367 = vpop.f32.mrb[0].mxu0
    %v368 = vadd.f32 %v294, %v367
    %v369 = vpop.f32.mrb[0].mxu0
    %v370 = vadd.f32 %v298, %v369
    %371 = vmatprep.mubr.f32.mxu0 0.0
    %372 = vmatmul.mubr.f32.gmra.mrb[0].mxu0 %v256
    %v373 = vpop.f32.mrb[0].mxu0
    %v374 = vadd.f32 %v294, %v373
    %v375 = vpop.f32.mrb[0].mxu0
    %v376 = vadd.f32 %v298, %v375
    %377 = vdwg.mxu0
    %v378 = vtanh.pop %v368
    %v379 = vtanh.pop %v370
    %v380 = vtanh.pop %v374
    %v381 = vtanh.pop %v376
    %382 = vst [vmem:[#allocation7] sm:$0xff] %v378
    %383 = vst [vmem:[#allocation7 + $0x8] sm:$0xff] %v379
    %384 = vst [vmem:[#allocation7 + $0x10] sm:$0xff] %v380
    %385 = vst [vmem:[#allocation7 + $0x18] sm:$0xff] %v381
    // Predicated region
    $region38: #{tpu_custom_call.1} parent=1 // pred_check
      _
    $region39: #{tpu_custom_call.1} parent=1 // pred_check_branch
      %387 = sbr.rel (0) target = $region41
    $region40: #{tpu_custom_call.1} parent=1 // pred_region
      %s389 = ssub.s32 512, 512
      %390 = vsyncadd [#allocation4], %s389
      %s391 = sshll.u32 [#allocation7], 4
      %s392 = int_to_ptr.vmem [resolvable:$true] %s391
      %397 = dma.vmem_to_hbm [thread:$0]  %s392, 512, %s7, [#allocation4], 256, 256, 16
    $region41: #{tpu_custom_call.1} parent=1 // pred_fallthru
      _
    // Predicated region
    $region42: #{tpu_custom_call.1} parent=1 // pred_check
      _
    $region43: #{tpu_custom_call.1} parent=1 // pred_check_branch
      %399 = sbr.rel (0) target = $region45
    $region44: #{tpu_custom_call.1} parent=1 // pred_region
      %400 = dma.done [#allocation4], 512
    $region45: #{tpu_custom_call.1} parent=1 // pred_fallthru
      _
    %401 = vsyncpa [#allocation3], 1
    %402 = vsyncpa [#allocation6], 1
    %403 = vsyncpa [#allocation4], 1

// kernel: tpu_custom_call.1
$region0: #{tpu_custom_call.1}
  #allocation0 [shape = 'u32[]', space=smem, size = 0x4, offset = 0x4, fixed_abs, tag = 'smem constant byte address 0x4 - core index']
  #allocation1 [shape = 'u32[144,128]{1,0:T(1,128)}', space=vmem, size = 0x12000, scoped, tag = 'internal scratch']
  %s0 = inlined_call_operand.vmem [shape: f32[16,8], index: 0, kind: input, shape index: {}]
  %s1 = inlined_call_operand.vmem [shape: f32[8,128], index: 1, kind: input, shape index: {}]
  %s2 = inlined_call_operand.vmem [shape: f32[1,128], index: 2, kind: input, shape index: {}]
  %s3 = inlined_call_operand.hbm [shape: f32[128,128], index: 3, kind: input, shape index: {}]
  %s4 = inlined_call_operand.vmem [shape: f32[1,128], index: 4, kind: input, shape index: {}]
  %s5 = inlined_call_operand.hbm [shape: f32[128,256], index: 5, kind: input, shape index: {}]
  %s6 = inlined_call_operand.vmem [shape: f32[1,256], index: 6, kind: input, shape index: {}]
  %s7 = inlined_call_operand.hbm [shape: f32[16,256], index: 7, kind: output, shape index: {}]
  %s8 = sld [smem:[#allocation0]]
  $region46: #{tpu_custom_call.1} parent=0
    _
  %s10 = ssub.s32 1, %s8
  %s11 = scalar_select 0, %s10, %s8
  $region1: #{tpu_custom_call.1} parent=0
    #allocation2 [shape = 'u8[65536]{0}', space=vmem, size = 0x10000, scoped, tag = 'input window, operand 3, single buffered']
    #allocation3 [shape = 's32[1]{0}', space=sflag, size = 0x4, scoped, tag = 'scoped memory for tpu_custom_call.1']
    #allocation4 [shape = 's32[1]{0}', space=sflag, size = 0x4, scoped, tag = 'scoped memory for tpu_custom_call.1']
    #allocation5 [shape = 'u8[131072]{0}', space=vmem, size = 0x20000, scoped, tag = 'input window, operand 5, single buffered']
    #allocation6 [shape = 's32[1]{0}', space=sflag, size = 0x4, scoped, tag = 'scoped memory for tpu_custom_call.1']
    #allocation7 [shape = 'u8[16384]{0}', space=vmem, size = 0x4000, scoped, tag = 'output window, operand 0, single buffered']
    %12 = vsyncpa [#allocation3], 0
    %13 = vsyncpa [#allocation6], 0
    %14 = vsyncpa [#allocation4], 0
    // Predicated region
    $region2: #{tpu_custom_call.1} parent=1 // pred_check
      _
    $region3: #{tpu_custom_call.1} parent=1 // pred_check_branch
      %16 = sbr.rel (0) target = $region5
    $region4: #{tpu_custom_call.1} parent=1 // pred_region
      _
    $region5: #{tpu_custom_call.1} parent=1 // pred_fallthru
      _
    // Predicated region
    $region6: #{tpu_custom_call.1} parent=1 // pred_check
      _
    $region7: #{tpu_custom_call.1} parent=1 // pred_check_branch
      %18 = sbr.rel (0) target = $region9
    $region8: #{tpu_custom_call.1} parent=1 // pred_region
      _
    $region9: #{tpu_custom_call.1} parent=1 // pred_fallthru
      _
    // Predicated region
    $region10: #{tpu_custom_call.1} parent=1 // pred_check
      _
    $region11: #{tpu_custom_call.1} parent=1 // pred_check_branch
      %20 = sbr.rel (0) target = $region13
    $region12: #{tpu_custom_call.1} parent=1 // pred_region
      _
    $region13: #{tpu_custom_call.1} parent=1 // pred_fallthru
      _
    // Predicated region
    $region14: #{tpu_custom_call.1} parent=1 // pred_check
      _
    $region15: #{tpu_custom_call.1} parent=1 // pred_check_branch
      %22 = sbr.rel (0) target = $region17
    $region16: #{tpu_custom_call.1} parent=1 // pred_region
      %s24 = ssub.s32 2048, 2048
      %25 = vsyncadd [#allocation3], %s24
      %s26 = sshll.u32 [#allocation2], 4
      %s27 = int_to_ptr.vmem [resolvable:$true] %s26
      %32 = dma.hbm_to_vmem [thread:$0]  %s3, 2048, %s27, [#allocation3], 128, 128, 8
    $region17: #{tpu_custom_call.1} parent=1 // pred_fallthru
      _
    // Predicated region
    $region18: #{tpu_custom_call.1} parent=1 // pred_check
      _
    $region19: #{tpu_custom_call.1} parent=1 // pred_check_branch
      %34 = sbr.rel (0) target = $region21
    $region20: #{tpu_custom_call.1} parent=1 // pred_region
      _
    $region21: #{tpu_custom_call.1} parent=1 // pred_fallthru
      _
    // Predicated region
    $region22: #{tpu_custom_call.1} parent=1 // pred_check
      _
    $region23: #{tpu_custom_call.1} parent=1 // pred_check_branch
      %36 = sbr.rel (0) target = $region25
    $region24: #{tpu_custom_call.1} parent=1 // pred_region
      %s38 = ssub.s32 4096, 4096
      %39 = vsyncadd [#allocation6], %s38
      %s40 = sshll.u32 [#allocation5], 4
      %s41 = int_to_ptr.vmem [resolvable:$true] %s40
      %46 = dma.hbm_to_vmem [thread:$0]  %s5, 4096, %s41, [#allocation6], 256, 256, 16
    $region25: #{tpu_custom_call.1} parent=1 // pred_fallthru
      _
    // Predicated region
    $region26: #{tpu_custom_call.1} parent=1 // pred_check
      _
    $region27: #{tpu_custom_call.1} parent=1 // pred_check_branch
      %48 = sbr.rel (0) target = $region29
    $region28: #{tpu_custom_call.1} parent=1 // pred_region
      _
    $region29: #{tpu_custom_call.1} parent=1 // pred_fallthru
      _
    // Predicated region
    $region30: #{tpu_custom_call.1} parent=1 // pred_check
      _
    $region31: #{tpu_custom_call.1} parent=1 // pred_check_branch
      %50 = sbr.rel (0) target = $region33
    $region32: #{tpu_custom_call.1} parent=1 // pred_region
      %51 = dma.done [#allocation3], 2048
    $region33: #{tpu_custom_call.1} parent=1 // pred_fallthru
      _
    // Predicated region
    $region34: #{tpu_custom_call.1} parent=1 // pred_check
      _
    $region35: #{tpu_custom_call.1} parent=1 // pred_check_branch
      %53 = sbr.rel (0) target = $region37
    $region36: #{tpu_custom_call.1} parent=1 // pred_region
      %54 = dma.done [#allocation6], 4096
    $region37: #{tpu_custom_call.1} parent=1 // pred_fallthru
      _
    %v55 = vld [vmem:[%s0] sm:$0xff]
    %v56 = vld [vmem:[%s0 + $0x8] sm:$0xff]
    %v57 = vld [vmem:[%s1] sm:$0xff]
    %v58 = vld [vmem:[%s2] sm:$0x1]
    %v60 = vlaneseq
    %v61 = vshrl.u32 %v60, 7
    %v62 = vsub.s32 0, %v61
    %v63 = vrot.slane %v58, %v62
    %vm65 = vcmask 64512
    %v67 = vsel %vm65, %v55, 0
    %v70 = vsel %vm65, %v56, 0
    %72 = vmatprep.subr.mxu0 0.0
    %73 = vmatpush1.msra.mxu0 %v57
    %74 = vmatprep.subr.mxu0 0.0
    %75 = vmatpush1.msra.mxu0 0.0
    %76 = vmatprep.subr.mxu0 0.0
    %77 = vmatpush1.msra.mxu0 0.0
    %78 = vmatprep.subr.mxu0 0.0
    %79 = vmatpush1.msra.mxu0 0.0
    %80 = vmatprep.subr.mxu0 0.0
    %81 = vmatpush1.msra.mxu0 0.0
    %82 = vmatprep.subr.mxu0 0.0
    %83 = vmatpush1.msra.mxu0 0.0
    %84 = vmatprep.subr.mxu0 0.0
    %85 = vmatpush1.msra.mxu0 0.0
    %86 = vmatprep.subr.mxu0 0.0
    %87 = vmatpush1.msra.mxu0 0.0
    %88 = vmatprep.subr.mxu0 0.0
    %89 = vmatpush1.msra.mxu0 0.0
    %90 = vmatprep.subr.mxu0 0.0
    %91 = vmatpush1.msra.mxu0 0.0
    %92 = vmatprep.subr.mxu0 0.0
    %93 = vmatpush1.msra.mxu0 0.0
    %94 = vmatprep.subr.mxu0 0.0
    %95 = vmatpush1.msra.mxu0 0.0
    %96 = vmatprep.subr.mxu0 0.0
    %97 = vmatpush1.msra.mxu0 0.0
    %98 = vmatprep.subr.mxu0 0.0
    %99 = vmatpush1.msra.mxu0 0.0
    %100 = vmatprep.subr.mxu0 0.0
    %101 = vmatpush1.msra.mxu0 0.0
    %102 = vmatprep.subr.mxu0 0.0
    %103 = vmatpush1.msra.mxu0 0.0
    %104 = vmatprep.subr.mxu0 0.0
    %105 = vmatpush1.msra.mxu0 0.0
    %106 = vmatprep.subr.mxu0 0.0
    %107 = vmatpush1.msra.mxu0 0.0
    %108 = vmatprep.subr.mxu0 0.0
    %109 = vmatpush1.msra.mxu0 0.0
    %110 = vmatprep.subr.mxu0 0.0
    %111 = vmatpush1.msra.mxu0 0.0
    %112 = vmatprep.subr.mxu0 0.0
    %113 = vmatpush1.msra.mxu0 0.0
    %114 = vmatprep.subr.mxu0 0.0
    %115 = vmatpush1.msra.mxu0 0.0
    %116 = vmatprep.subr.mxu0 0.0
    %117 = vmatpush1.msra.mxu0 0.0
    %118 = vmatprep.subr.mxu0 0.0
    %119 = vmatpush1.msra.mxu0 0.0
    %120 = vmatprep.subr.mxu0 0.0
    %121 = vmatpush1.msra.mxu0 0.0
    %122 = vmatprep.subr.mxu0 0.0
    %123 = vmatpush1.msra.mxu0 0.0
    %124 = vmatprep.subr.mxu0 0.0
    %125 = vmatpush1.msra.mxu0 0.0
    %126 = vmatprep.subr.mxu0 0.0
    %127 = vmatpush1.msra.mxu0 0.0
    %128 = vmatprep.subr.mxu0 0.0
    %129 = vmatpush1.msra.mxu0 0.0
    %130 = vmatprep.subr.mxu0 0.0
    %131 = vmatpush1.msra.mxu0 0.0
    %132 = vmatprep.subr.mxu0 0.0
    %133 = vmatpush1.msra.mxu0 0.0
    %134 = vmatprep.subr.mxu0 0.0
    %135 = vmatpush1.msra.mxu0 0.0
    %136 = vmatprep.mubr.f32.mxu0 0.0
    %137 = vmatmul.mubr.f32.gmra.mrb[0].mxu0 %v67
    %v138 = vpop.f32.mrb[0].mxu0
    %v139 = vadd.f32 %v63, %v138
    %v140 = vpop.f32.mrb[0].mxu0
    %141 = vmatprep.mubr.f32.mxu0 0.0
    %142 = vmatmul.mubr.f32.gmra.mrb[0].mxu0 %v70
    %v143 = vpop.f32.mrb[0].mxu0
    %v144 = vadd.f32 %v63, %v143
    %v145 = vpop.f32.mrb[0].mxu0
    %146 = vdwg.mxu0
    %vm147 = vcmp.gt.f32.partialorder %v139, 0.0
    %vm148 = vcmp.gt.f32.partialorder %v144, 0.0
    %v149 = vmul.f32 %v139, 0.01
    %v150 = vmul.f32 %v144, 0.01
    %v151 = vsel %vm147, %v139, %v149
    %v152 = vsel %vm148, %v144, %v150
    %v153 = vld [vmem:[#allocation2] sm:$0xff]
    %v154 = vld [vmem:[#allocation2 + $0x8] sm:$0xff]
    %v155 = vld [vmem:[#allocation2 + $0x10] sm:$0xff]
    %v156 = vld [vmem:[#allocation2 + $0x18] sm:$0xff]
    %v157 = vld [vmem:[#allocation2 + $0x20] sm:$0xff]
    %v158 = vld [vmem:[#allocation2 + $0x28] sm:$0xff]
    %v159 = vld [vmem:[#allocation2 + $0x30] sm:$0xff]
    %v160 = vld [vmem:[#allocation2 + $0x38] sm:$0xff]
    %v161 = vld [vmem:[#allocation2 + $0x40] sm:$0xff]
    %v162 = vld [vmem:[#allocation2 + $0x48] sm:$0xff]
    %v163 = vld [vmem:[#allocation2 + $0x50] sm:$0xff]
    %v164 = vld [vmem:[#allocation2 + $0x58] sm:$0xff]
    %v165 = vld [vmem:[#allocation2 + $0x60] sm:$0xff]
    %v166 = vld [vmem:[#allocation2 + $0x68] sm:$0xff]
    %v167 = vld [vmem:[#allocation2 + $0x70] sm:$0xff]
    %v168 = vld [vmem:[#allocation2 + $0x78] sm:$0xff]
    %v169 = vld [vmem:[%s4] sm:$0x1]
    %v171 = vlaneseq
    %v172 = vshrl.u32 %v171, 7
    %v173 = vsub.s32 0, %v172
    %v174 = vrot.slane %v169, %v173
    %176 = vmatprep.subr.mxu0 0.0
    %177 = vmatpush1.msra.mxu0 %v153
    %178 = vmatprep.subr.mxu0 0.0
    %179 = vmatpush1.msra.mxu0 %v154
    %180 = vmatprep.subr.mxu0 0.0
    %181 = vmatpush1.msra.mxu0 %v155
    %182 = vmatprep.subr.mxu0 0.0
    %183 = vmatpush1.msra.mxu0 %v156
    %184 = vmatprep.subr.mxu0 0.0
    %185 = vmatpush1.msra.mxu0 %v157
    %186 = vmatprep.subr.mxu0 0.0
    %187 = vmatpush1.msra.mxu0 %v158
    %188 = vmatprep.subr.mxu0 0.0
    %189 = vmatpush1.msra.mxu0 %v159
    %190 = vmatprep.subr.mxu0 0.0
    %191 = vmatpush1.msra.mxu0 %v160
    %192 = vmatprep.subr.mxu0 0.0
    %193 = vmatpush1.msra.mxu0 %v161
    %194 = vmatprep.subr.mxu0 0.0
    %195 = vmatpush1.msra.mxu0 %v162
    %196 = vmatprep.subr.mxu0 0.0
    %197 = vmatpush1.msra.mxu0 %v163
    %198 = vmatprep.subr.mxu0 0.0
    %199 = vmatpush1.msra.mxu0 %v164
    %200 = vmatprep.subr.mxu0 0.0
    %201 = vmatpush1.msra.mxu0 %v165
    %202 = vmatprep.subr.mxu0 0.0
    %203 = vmatpush1.msra.mxu0 %v166
    %204 = vmatprep.subr.mxu0 0.0
    %205 = vmatpush1.msra.mxu0 %v167
    %206 = vmatprep.subr.mxu0 0.0
    %207 = vmatpush1.msra.mxu0 %v168
    %208 = vmatprep.subr.mxu0 0.0
    %209 = vmatpush1.msra.mxu0 0.0
    %210 = vmatprep.subr.mxu0 0.0
    %211 = vmatpush1.msra.mxu0 0.0
    %212 = vmatprep.subr.mxu0 0.0
    %213 = vmatpush1.msra.mxu0 0.0
    %214 = vmatprep.subr.mxu0 0.0
    %215 = vmatpush1.msra.mxu0 0.0
    %216 = vmatprep.subr.mxu0 0.0
    %217 = vmatpush1.msra.mxu0 0.0
    %218 = vmatprep.subr.mxu0 0.0
    %219 = vmatpush1.msra.mxu0 0.0
    %220 = vmatprep.subr.mxu0 0.0
    %221 = vmatpush1.msra.mxu0 0.0
    %222 = vmatprep.subr.mxu0 0.0
    %223 = vmatpush1.msra.mxu0 0.0
    %224 = vmatprep.subr.mxu0 0.0
    %225 = vmatpush1.msra.mxu0 0.0
    %226 = vmatprep.subr.mxu0 0.0
    %227 = vmatpush1.msra.mxu0 0.0
    %228 = vmatprep.subr.mxu0 0.0
    %229 = vmatpush1.msra.mxu0 0.0
    %230 = vmatprep.subr.mxu0 0.0
    %231 = vmatpush1.msra.mxu0 0.0
    %232 = vmatprep.subr.mxu0 0.0
    %233 = vmatpush1.msra.mxu0 0.0
    %234 = vmatprep.subr.mxu0 0.0
    %235 = vmatpush1.msra.mxu0 0.0
    %236 = vmatprep.subr.mxu0 0.0
    %237 = vmatpush1.msra.mxu0 0.0
    %238 = vmatprep.subr.mxu0 0.0
    %239 = vmatpush1.msra.mxu0 0.0
    %240 = vmatprep.mubr.f32.mxu0 0.0
    %241 = vmatmul.mubr.f32.gmra.mrb[0].mxu0 %v151
    %v242 = vpop.f32.mrb[0].mxu0
    %v243 = vadd.f32 %v174, %v242
    %v244 = vpop.f32.mrb[0].mxu0
    %245 = vmatprep.mubr.f32.mxu0 0.0
    %246 = vmatmul.mubr.f32.gmra.mrb[0].mxu0 %v152
    %v247 = vpop.f32.mrb[0].mxu0
    %v248 = vadd.f32 %v174, %v247
    %v249 = vpop.f32.mrb[0].mxu0
    %250 = vdwg.mxu0
    %vm251 = vcmp.gt.f32.partialorder %v243, 0.0
    %vm252 = vcmp.gt.f32.partialorder %v248, 0.0
    %v253 = vmul.f32 %v243, 0.01
    %v254 = vmul.f32 %v248, 0.01
    %v255 = vsel %vm251, %v243, %v253
    %v256 = vsel %vm252, %v248, %v254
    %v257 = vld [vmem:[#allocation5] sm:$0xff]
    %v258 = vld [vmem:[#allocation5 + $0x8] sm:$0xff]
    %v259 = vld [vmem:[#allocation5 + $0x10] sm:$0xff]
    %v260 = vld [vmem:[#allocation5 + $0x18] sm:$0xff]
    %v261 = vld [vmem:[#allocation5 + $0x20] sm:$0xff]
    %v262 = vld [vmem:[#allocation5 + $0x28] sm:$0xff]
    %v263 = vld [vmem:[#allocation5 + $0x30] sm:$0xff]
    %v264 = vld [vmem:[#allocation5 + $0x38] sm:$0xff]
    %v265 = vld [vmem:[#allocation5 + $0x40] sm:$0xff]
    %v266 = vld [vmem:[#allocation5 + $0x48] sm:$0xff]
    %v267 = vld [vmem:[#allocation5 + $0x50] sm:$0xff]
    %v268 = vld [vmem:[#allocation5 + $0x58] sm:$0xff]
    %v269 = vld [vmem:[#allocation5 + $0x60] sm:$0xff]
    %v270 = vld [vmem:[#allocation5 + $0x68] sm:$0xff]
    %v271 = vld [vmem:[#allocation5 + $0x70] sm:$0xff]
    %v272 = vld [vmem:[#allocation5 + $0x78] sm:$0xff]
    %v273 = vld [vmem:[#allocation5 + $0x80] sm:$0xff]
    %v274 = vld [vmem:[#allocation5 + $0x88] sm:$0xff]
    %v275 = vld [vmem:[#allocation5 + $0x90] sm:$0xff]
    %v276 = vld [vmem:[#allocation5 + $0x98] sm:$0xff]
    %v277 = vld [vmem:[#allocation5 + $0xa0] sm:$0xff]
    %v278 = vld [vmem:[#allocation5 + $0xa8] sm:$0xff]
    %v279 = vld [vmem:[#allocation5 + $0xb0] sm:$0xff]
    %v280 = vld [vmem:[#allocation5 + $0xb8] sm:$0xff]
    %v281 = vld [vmem:[#allocation5 + $0xc0] sm:$0xff]
    %v282 = vld [vmem:[#allocation5 + $0xc8] sm:$0xff]
    %v283 = vld [vmem:[#allocation5 + $0xd0] sm:$0xff]
    %v284 = vld [vmem:[#allocation5 + $0xd8] sm:$0xff]
    %v285 = vld [vmem:[#allocation5 + $0xe0] sm:$0xff]
    %v286 = vld [vmem:[#allocation5 + $0xe8] sm:$0xff]
    %v287 = vld [vmem:[#allocation5 + $0xf0] sm:$0xff]
    %v288 = vld [vmem:[#allocation5 + $0xf8] sm:$0xff]
    %v289 = vld [vmem:[%s6] sm:$0x3]
    %v291 = vlaneseq
    %v292 = vshrl.u32 %v291, 7
    %v293 = vsub.s32 0, %v292
    %v294 = vrot.slane %v289, %v293
    %v295 = vlaneseq
    %v296 = vshrl.u32 %v295, 7
    %v297 = vsub.s32 1, %v296
    %v298 = vrot.slane %v289, %v297
    %301 = vmatprep.subr.mxu0 %v258
    %302 = vmatpush1.msra.mxu0 %v257
    %303 = vmatprep.subr.mxu0 %v260
    %304 = vmatpush1.msra.mxu0 %v259
    %305 = vmatprep.subr.mxu0 %v262
    %306 = vmatpush1.msra.mxu0 %v261
    %307 = vmatprep.subr.mxu0 %v264
    %308 = vmatpush1.msra.mxu0 %v263
    %309 = vmatprep.subr.mxu0 %v266
    %310 = vmatpush1.msra.mxu0 %v265
    %311 = vmatprep.subr.mxu0 %v268
    %312 = vmatpush1.msra.mxu0 %v267
    %313 = vmatprep.subr.mxu0 %v270
    %314 = vmatpush1.msra.mxu0 %v269
    %315 = vmatprep.subr.mxu0 %v272
    %316 = vmatpush1.msra.mxu0 %v271
    %317 = vmatprep.subr.mxu0 %v274
    %318 = vmatpush1.msra.mxu0 %v273
    %319 = vmatprep.subr.mxu0 %v276
    %320 = vmatpush1.msra.mxu0 %v275
    %321 = vmatprep.subr.mxu0 %v278
    %322 = vmatpush1.msra.mxu0 %v277
    %323 = vmatprep.subr.mxu0 %v280
    %324 = vmatpush1.msra.mxu0 %v279
    %325 = vmatprep.subr.mxu0 %v282
    %326 = vmatpush1.msra.mxu0 %v281
    %327 = vmatprep.subr.mxu0 %v284
    %328 = vmatpush1.msra.mxu0 %v283
    %329 = vmatprep.subr.mxu0 %v286
    %330 = vmatpush1.msra.mxu0 %v285
    %331 = vmatprep.subr.mxu0 %v288
    %332 = vmatpush1.msra.mxu0 %v287
    %333 = vmatprep.subr.mxu0 0.0
    %334 = vmatpush1.msra.mxu0 0.0
    %335 = vmatprep.subr.mxu0 0.0
    %336 = vmatpush1.msra.mxu0 0.0
    %337 = vmatprep.subr.mxu0 0.0
    %338 = vmatpush1.msra.mxu0 0.0
    %339 = vmatprep.subr.mxu0 0.0
    %340 = vmatpush1.msra.mxu0 0.0
    %341 = vmatprep.subr.mxu0 0.0
    %342 = vmatpush1.msra.mxu0 0.0
    %343 = vmatprep.subr.mxu0 0.0
    %344 = vmatpush1.msra.mxu0 0.0
    %345 = vmatprep.subr.mxu0 0.0
    %346 = vmatpush1.msra.mxu0 0.0
    %347 = vmatprep.subr.mxu0 0.0
    %348 = vmatpush1.msra.mxu0 0.0
    %349 = vmatprep.subr.mxu0 0.0
    %350 = vmatpush1.msra.mxu0 0.0
    %351 = vmatprep.subr.mxu0 0.0
    %352 = vmatpush1.msra.mxu0 0.0
    %353 = vmatprep.subr.mxu0 0.0
    %354 = vmatpush1.msra.mxu0 0.0
    %355 = vmatprep.subr.mxu0 0.0
    %356 = vmatpush1.msra.mxu0 0.0
    %357 = vmatprep.subr.mxu0 0.0
    %358 = vmatpush1.msra.mxu0 0.0
    %359 = vmatprep.subr.mxu0 0.0
    %360 = vmatpush1.msra.mxu0 0.0
    %361 = vmatprep.subr.mxu0 0.0
    %362 = vmatpush1.msra.mxu0 0.0
    %363 = vmatprep.subr.mxu0 0.0
    %364 = vmatpush1.msra.mxu0 0.0
    %365 = vmatprep.mubr.f32.mxu0 0.0
    %366 = vmatmul.mubr.f32.gmra.mrb[0].mxu0 %v255
    %v367 = vpop.f32.mrb[0].mxu0
    %v368 = vadd.f32 %v294, %v367
    %v369 = vpop.f32.mrb[0].mxu0
    %v370 = vadd.f32 %v298, %v369
    %371 = vmatprep.mubr.f32.mxu0 0.0
    %372 = vmatmul.mubr.f32.gmra.mrb[0].mxu0 %v256
    %v373 = vpop.f32.mrb[0].mxu0
    %v374 = vadd.f32 %v294, %v373
    %v375 = vpop.f32.mrb[0].mxu0
    %v376 = vadd.f32 %v298, %v375
    %377 = vdwg.mxu0
    %v378 = vtanh.pop %v368
    %v379 = vtanh.pop %v370
    %v380 = vtanh.pop %v374
    %v381 = vtanh.pop %v376
    %382 = vst [vmem:[#allocation7] sm:$0xff] %v378
    %383 = vst [vmem:[#allocation7 + $0x8] sm:$0xff] %v379
    %384 = vst [vmem:[#allocation7 + $0x10] sm:$0xff] %v380
    %385 = vst [vmem:[#allocation7 + $0x18] sm:$0xff] %v381
    // Predicated region
    $region38: #{tpu_custom_call.1} parent=1 // pred_check
      _
    $region39: #{tpu_custom_call.1} parent=1 // pred_check_branch
      %387 = sbr.rel (0) target = $region41
    $region40: #{tpu_custom_call.1} parent=1 // pred_region
      %s389 = ssub.s32 512, 512
      %390 = vsyncadd [#allocation4], %s389
      %s391 = sshll.u32 [#allocation7], 4
      %s392 = int_to_ptr.vmem [resolvable:$true] %s391
      %397 = dma.vmem_to_hbm [thread:$0]  %s392, 512, %s7, [#allocation4], 256, 256, 16
    $region41: #{tpu_custom_call.1} parent=1 // pred_fallthru
      _
    // Predicated region
    $region42: #{tpu_custom_call.1} parent=1 // pred_check
      _
    $region43: #{tpu_custom_call.1} parent=1 // pred_check_branch
      %399 = sbr.rel (0) target = $region45
    $region44: #{tpu_custom_call.1} parent=1 // pred_region
      %400 = dma.done [#allocation4], 512
    $region45: #{tpu_custom_call.1} parent=1 // pred_fallthru
      _
    %401 = vsyncpa [#allocation3], 1
    %402 = vsyncpa [#allocation6], 1
    %403 = vsyncpa [#allocation4], 1

</llo_original>
